<compile_context>
chip_gen: v5e
topology: v5e:2x2
jax: 0.10.0
libtpu: 0.0.40
codegen_flags: <defaults>
</compile_context>

<pallas_src>
import functools

import jax
import jax.numpy as jnp
from jax.experimental import pallas as pl
from jax.experimental.pallas import tpu as pltpu


def _round_up(x, m):
    return ((x + m - 1) // m) * m


def nam_kernel(x_ref, wexp_ref, ebexp_ref, lin_ref, logits_ref):
    # x_ref:      (TB, F)
    # wexp_ref:   (F, F*H)   block matrix: row f holds exp(exu_w[f]) in its block
    # ebexp_ref:  (1, F*H)   exu_b[f] * exp(exu_w[f, j]) flattened
    # lin_ref:    (F*H, FP)  block-diagonal lin_w, zero-padded columns F..FP-1
    # logits_ref: (TB, FP)

    # ExU layer: x[b,f]*exp(w[f,j]) via MXU (fuses the F->F*H lane expand).
    xe = jnp.dot(x_ref[...], wexp_ref[...],
                 preferred_element_type=jnp.float32)          # (TB, F*H)
    # (x - b) * exp(w) = x*exp(w) - b*exp(w); ReLU-1 == clip to [0, 1].
    h = jnp.clip(xe - ebexp_ref[...], 0.0, 1.0)               # (TB, F*H)
    # Per-feature linear head: block-diagonal matmul on the MXU, lane-dense out.
    logits_ref[...] = jnp.dot(h, lin_ref[...],
                              preferred_element_type=jnp.float32)


@functools.partial(jax.jit, static_argnames=("tb",))
def nam_forward(x, exu_w, exu_b, lin_w, nam_bias, *, tb=512):
    B, F = x.shape
    Fw, H = exu_w.shape
    assert Fw == F
    FH = F * H
    FP = _round_up(F, 128)          # lane-dense padded feature dim for the store

    # ---- weight-only parameter prep (amortized across forward calls) ----
    ew_exp = jnp.exp(exu_w).astype(jnp.float32)                       # (F, H)
    # Wexp[f, g*H + j] = (f == g) * exp(exu_w[g, j])
    wexp_mat = (jnp.eye(F, dtype=jnp.float32)[:, :, None]
                * ew_exp[None, :, :]).reshape(F, FH)                  # (F, FH)
    # ebexp[0, f*H + j] = exu_b[f] * exp(exu_w[f, j])
    ebexp = (exu_b.astype(jnp.float32)[:, None] * ew_exp).reshape(1, FH)
    # Lbd[f*H + j, g] = (f == g) * lin_w[f, j], padded to FP columns.
    lin_bd = (lin_w.astype(jnp.float32)[:, :, None]
              * jnp.eye(F, dtype=jnp.float32)[:, None, :]).reshape(FH, F)
    lin_bd = jnp.pad(lin_bd, ((0, 0), (0, FP - F)))                   # (FH, FP)

    # ---- batch tiling ----
    tb_eff = min(tb, max(8, _round_up(B, 8)))
    B_pad = _round_up(B, tb_eff)
    x_pad = jnp.pad(x.astype(jnp.float32), ((0, B_pad - B), (0, 0)))
    grid = (pl.cdiv(B_pad, tb_eff),)

    logits_padded = pl.pallas_call(
        nam_kernel,
        out_shape=jax.ShapeDtypeStruct((B_pad, FP), jnp.float32),
        grid=grid,
        in_specs=[
            pl.BlockSpec((tb_eff, F), lambda i: (i, 0)),   # x: batch tiled
            pl.BlockSpec((F, FH), lambda i: (0, 0)),       # params resident
            pl.BlockSpec((1, FH), lambda i: (0, 0)),
            pl.BlockSpec((FH, FP), lambda i: (0, 0)),
        ],
        out_specs=pl.BlockSpec((tb_eff, FP), lambda i: (i, 0)),
        compiler_params=pltpu.CompilerParams(
            dimension_semantics=("parallel",),
            vmem_limit_bytes=32 * 1024 * 1024,
        ),
    )(x_pad, wexp_mat, ebexp, lin_bd)

    concat_logits = logits_padded[:B, :F]
    out_sum = jnp.sum(concat_logits, axis=1) + nam_bias[0]
    return out_sum, concat_logits


def nam_reference(x, exu_w, exu_b, lin_w, nam_bias):
    # Pure-JAX reference mirroring the PyTorch forward.
    centered = x - exu_b[None, :]                              # (B, F)
    h = centered[:, :, None] * jnp.exp(exu_w)[None, :, :]      # (B, F, H)
    h = jnp.clip(h, 0.0, 1.0)
    logits = jnp.sum(h * lin_w[None, :, :], axis=-1)           # (B, F)
    return jnp.sum(logits, axis=1) + nam_bias[0], logits


if __name__ == "__main__":
    # Small synthetic configuration:
    #   n_features = 4, in_size = [1]*4, hidden_profile = [32], out_size = 1
    B, F, H = 8, 4, 32

    key = jax.random.PRNGKey(0)
    kx, kw, kb, kl = jax.random.split(key, 4)

    x = jax.random.normal(kx, (B, F), dtype=jnp.float32)

    # ExU init (as in the NAM paper): weight ~ N(4.0, 0.5), bias ~ N(0, 0.5)
    exu_w = 4.0 + 0.5 * jax.random.normal(kw, (F, H), dtype=jnp.float32)
    exu_b = 0.5 * jax.random.normal(kb, (F,), dtype=jnp.float32)
    # Final nn.Linear(H, 1, bias=False) weights per feature, stacked: (F, H)
    lin_w = jax.random.normal(kl, (F, H), dtype=jnp.float32) / jnp.sqrt(H)
    # NAM bias initialized to 0.0 (nn.init.constant_)
    nam_bias = jnp.zeros((1,), dtype=jnp.float32)

    out_sum, concat_logits = nam_forward(x, exu_w, exu_b, lin_w, nam_bias)
    jax.block_until_ready((out_sum, concat_logits))

    ref_sum, ref_logits = nam_reference(x, exu_w, exu_b, lin_w, nam_bias)
    assert out_sum.shape == (B,)
    assert concat_logits.shape == (B, F)
    assert jnp.allclose(out_sum, ref_sum, atol=1e-4, rtol=1e-4)
    assert jnp.allclose(concat_logits, ref_logits, atol=1e-4, rtol=1e-4)

    print("KERNEL_OK")
</pallas_src>

<mosaic_0001>
module attributes {stable_mosaic.version = 11 : i64} {
  func.func @nam_kernel(%arg0: i32, %arg1: memref<8x4xf32, #tpu.memory_space<vmem>>, %arg2: memref<4x128xf32, #tpu.memory_space<vmem>>, %arg3: memref<1x128xf32, #tpu.memory_space<vmem>>, %arg4: memref<128x128xf32, #tpu.memory_space<vmem>>, %arg5: memref<8x128xf32, #tpu.memory_space<vmem>>) attributes {dimension_semantics = [#tpu.dimension_semantics<parallel>], iteration_bounds = array<i64: 1>, scalar_prefetch = 0 : i64, scratch_operands = 0 : i64, tpu.core_type = #tpu.core_type<tc>, window_params = [{transform_indices = @transform_0, window_bounds = array<i64: 8, 4>}, {pipeline_mode = #tpu.pipeline_mode<synchronous>, transform_indices = @transform_1, window_bounds = array<i64: 4, 128>}, {pipeline_mode = #tpu.pipeline_mode<synchronous>, transform_indices = @transform_2, window_bounds = array<i64: 1, 128>}, {pipeline_mode = #tpu.pipeline_mode<synchronous>, transform_indices = @transform_3, window_bounds = array<i64: 128, 128>}, {transform_indices = @transform_4, window_bounds = array<i64: 8, 128>}]} {
    %c0 = arith.constant 0 : index
    %c0_0 = arith.constant 0 : index
    %0 = vector.load %arg1[%c0, %c0_0] : memref<8x4xf32, #tpu.memory_space<vmem>>, vector<8x4xf32>
    %c0_1 = arith.constant 0 : index
    %c0_2 = arith.constant 0 : index
    %1 = vector.load %arg2[%c0_1, %c0_2] : memref<4x128xf32, #tpu.memory_space<vmem>>, vector<4x128xf32>
    %cst = arith.constant dense<0.000000e+00> : vector<8x128xf32>
    %2 = tpu.matmul %0, %1, %cst {dimension_numbers = #tpu.dot_dimension_numbers<[1], [0], [0], [1], [0, 0, 1, 1], [], []>} : vector<8x4xf32>, vector<4x128xf32>, vector<8x128xf32> -> vector<8x128xf32>
    %c0_3 = arith.constant 0 : index
    %c0_4 = arith.constant 0 : index
    %3 = vector.load %arg3[%c0_3, %c0_4] : memref<1x128xf32, #tpu.memory_space<vmem>>, vector<1x128xf32>
    %4 = vector.broadcast %3 : vector<1x128xf32> to vector<8x128xf32>
    %5 = arith.subf %2, %4 : vector<8x128xf32>
    %cst_5 = arith.constant 0.000000e+00 : f32
    %cst_6 = arith.constant 1.000000e+00 : f32
    %6 = vector.broadcast %cst_5 : f32 to vector<8x128xf32>
    %7 = arith.maximumf %6, %5 : vector<8x128xf32>
    %8 = vector.broadcast %cst_6 : f32 to vector<8x128xf32>
    %9 = arith.minimumf %8, %7 : vector<8x128xf32>
    %c0_7 = arith.constant 0 : index
    %c0_8 = arith.constant 0 : index
    %10 = vector.load %arg4[%c0_7, %c0_8] : memref<128x128xf32, #tpu.memory_space<vmem>>, vector<128x128xf32>
    %cst_9 = arith.constant dense<0.000000e+00> : vector<8x128xf32>
    %11 = tpu.matmul %9, %10, %cst_9 {dimension_numbers = #tpu.dot_dimension_numbers<[1], [0], [0], [1], [0, 0, 1, 1], [], []>} : vector<8x128xf32>, vector<128x128xf32>, vector<8x128xf32> -> vector<8x128xf32>
    %c0_10 = arith.constant 0 : index
    %c0_11 = arith.constant 0 : index
    %12 = vector.load %arg5[%c0_10, %c0_11] : memref<8x128xf32, #tpu.memory_space<vmem>>, vector<8x128xf32>
    tpu.vector_store %arg5[%c0_10, %c0_11], %11 {strides = array<i32>} : memref<8x128xf32, #tpu.memory_space<vmem>>, vector<8x128xf32>,
    return
  }
  func.func @transform_0(%arg0: i32) -> (i32, i32) {
    %c0_i32 = arith.constant 0 : i32
    %c0_i32_0 = arith.constant 0 : i32
    return %arg0, %c0_i32 : i32, i32
  }
  func.func @transform_1(%arg0: i32) -> (i32, i32) {
    %c0_i32 = arith.constant 0 : i32
    %c0_i32_0 = arith.constant 0 : i32
    %c0_i32_1 = arith.constant 0 : i32
    return %c0_i32, %c0_i32_0 : i32, i32
  }
  func.func @transform_2(%arg0: i32) -> (i32, i32) {
    %c0_i32 = arith.constant 0 : i32
    %c0_i32_0 = arith.constant 0 : i32
    %c0_i32_1 = arith.constant 0 : i32
    return %c0_i32, %c0_i32_0 : i32, i32
  }
  func.func @transform_3(%arg0: i32) -> (i32, i32) {
    %c0_i32 = arith.constant 0 : i32
    %c0_i32_0 = arith.constant 0 : i32
    %c0_i32_1 = arith.constant 0 : i32
    return %c0_i32, %c0_i32_0 : i32, i32
  }
  func.func @transform_4(%arg0: i32) -> (i32, i32) {
    %c0_i32 = arith.constant 0 : i32
    %c0_i32_0 = arith.constant 0 : i32
    return %arg0, %c0_i32 : i32, i32
  }
}

</mosaic_0001>

<llo_original>
// kernel: nam_forward.1
$region0: #{nam_forward.1}
  #allocation0 [shape = 'u32[]', space=smem, size = 0x4, offset = 0x4, fixed_abs, tag = 'smem constant byte address 0x4 - core index']
  #allocation1 [shape = 'u32[72,128]{1,0:T(1,128)}', space=vmem, size = 0x9000, scoped, tag = 'internal scratch']
  %s0 = inlined_call_operand.vmem [shape: f32[8,4], index: 0, kind: input, shape index: {}]
  %s1 = inlined_call_operand.vmem [shape: f32[4,128], index: 1, kind: input, shape index: {}]
  %s2 = inlined_call_operand.vmem [shape: f32[1,128], index: 2, kind: input, shape index: {}]
  %s3 = inlined_call_operand.vmem [shape: f32[128,128], index: 3, kind: input, shape index: {}]
  %s4 = inlined_call_operand.vmem [shape: f32[8,128], index: 4, kind: output, shape index: {}]
  %s5 = sld [smem:[#allocation0]]
  $region26: #{nam_forward.1} parent=0
    _
  %s7 = ssub.s32 1, %s5
  %s8 = scalar_select 0, %s7, %s5
  // Predicated region
  $region2: #{nam_forward.1} parent=0 // pred_check
    _
  $region3: #{nam_forward.1} parent=0 // pred_check_branch
    %10 = sbr.rel (0) target = $region5
  $region4: #{nam_forward.1} parent=0 // pred_region
    _
  $region5: #{nam_forward.1} parent=0 // pred_fallthru
    _
  // Predicated region
  $region6: #{nam_forward.1} parent=0 // pred_check
    _
  $region7: #{nam_forward.1} parent=0 // pred_check_branch
    %12 = sbr.rel (0) target = $region9
  $region8: #{nam_forward.1} parent=0 // pred_region
    _
  $region9: #{nam_forward.1} parent=0 // pred_fallthru
    _
  // Predicated region
  $region10: #{nam_forward.1} parent=0 // pred_check
    _
  $region11: #{nam_forward.1} parent=0 // pred_check_branch
    %14 = sbr.rel (0) target = $region13
  $region12: #{nam_forward.1} parent=0 // pred_region
    _
  $region13: #{nam_forward.1} parent=0 // pred_fallthru
    _
  // Predicated region
  $region14: #{nam_forward.1} parent=0 // pred_check
    _
  $region15: #{nam_forward.1} parent=0 // pred_check_branch
    %16 = sbr.rel (0) target = $region17
  $region16: #{nam_forward.1} parent=0 // pred_region
    _
  $region17: #{nam_forward.1} parent=0 // pred_fallthru
    _
  %v17 = vld [vmem:[%s0] sm:$0xff]
  %v18 = vld [vmem:[%s1] sm:$0xf]
  %vm19 = vcmask 31744
  %v21 = vsel %vm19, %v17, 0
  %vm23 = vcmask 1043456
  %v25 = vsel %vm23, %v18, 0
  %27 = vmatpush.msra.mxu0 0.0
  %28 = vmatpush.msra.mxu0 0.0
  %29 = vmatpush.msra.mxu0 0.0
  %30 = vmatpush.msra.mxu0 0.0
  %31 = vmatpush.msra.mxu0 0.0
  %32 = vmatpush.msra.mxu0 0.0
  %33 = vmatpush.msra.mxu0 0.0
  %34 = vmatpush.msra.mxu0 0.0
  %35 = vmatpush.msra.mxu0 0.0
  %36 = vmatpush.msra.mxu0 0.0
  %37 = vmatpush.msra.mxu0 0.0
  %38 = vmatpush.msra.mxu0 0.0
  %39 = vmatpush.msra.mxu0 0.0
  %40 = vmatpush.msra.mxu0 0.0
  %41 = vmatpush.msra.mxu0 0.0
  %42 = vmatpush.msra.mxu0 %v25
  %43 = vmatmul.f32.gmra.mxu0 %v21
  %v44 = vpop.f32.mrf.mxu0
  %v45 = vadd.f32 0.0, %v44
  %46 = vdwg.mxu0
  %v47 = vld [vmem:[%s2] sm:$0x1]
  %v49 = vperm.slane %v47, 0
  %v51 = vsub.f32 %v45, %v49
  %v52 = vmax.f32 %v51, 0.0
  %v53 = vmin.f32 %v52, 1.0
  %v54 = vld [vmem:[%s3] sm:$0xff]
  %v55 = vld [vmem:[%s3 + $0x8] sm:$0xff]
  %v56 = vld [vmem:[%s3 + $0x10] sm:$0xff]
  %v57 = vld [vmem:[%s3 + $0x18] sm:$0xff]
  %v58 = vld [vmem:[%s3 + $0x20] sm:$0xff]
  %v59 = vld [vmem:[%s3 + $0x28] sm:$0xff]
  %v60 = vld [vmem:[%s3 + $0x30] sm:$0xff]
  %v61 = vld [vmem:[%s3 + $0x38] sm:$0xff]
  %v62 = vld [vmem:[%s3 + $0x40] sm:$0xff]
  %v63 = vld [vmem:[%s3 + $0x48] sm:$0xff]
  %v64 = vld [vmem:[%s3 + $0x50] sm:$0xff]
  %v65 = vld [vmem:[%s3 + $0x58] sm:$0xff]
  %v66 = vld [vmem:[%s3 + $0x60] sm:$0xff]
  %v67 = vld [vmem:[%s3 + $0x68] sm:$0xff]
  %v68 = vld [vmem:[%s3 + $0x70] sm:$0xff]
  %v69 = vld [vmem:[%s3 + $0x78] sm:$0xff]
  %70 = vmatpush.msra.mxu0 %v69
  %71 = vmatpush.msra.mxu0 %v68
  %72 = vmatpush.msra.mxu0 %v67
  %73 = vmatpush.msra.mxu0 %v66
  %74 = vmatpush.msra.mxu0 %v65
  %75 = vmatpush.msra.mxu0 %v64
  %76 = vmatpush.msra.mxu0 %v63
  %77 = vmatpush.msra.mxu0 %v62
  %78 = vmatpush.msra.mxu0 %v61
  %79 = vmatpush.msra.mxu0 %v60
  %80 = vmatpush.msra.mxu0 %v59
  %81 = vmatpush.msra.mxu0 %v58
  %82 = vmatpush.msra.mxu0 %v57
  %83 = vmatpush.msra.mxu0 %v56
  %84 = vmatpush.msra.mxu0 %v55
  %85 = vmatpush.msra.mxu0 %v54
  %86 = vmatmul.f32.gmra.mxu0 %v53
  %v87 = vpop.f32.mrf.mxu0
  %v88 = vadd.f32 0.0, %v87
  %89 = vdwg.mxu0
  %90 = vst [vmem:[%s4] sm:$0xff] %v88
  // Predicated region
  $region18: #{nam_forward.1} parent=0 // pred_check
    _
  $region19: #{nam_forward.1} parent=0 // pred_check_branch
    %92 = sbr.rel (0) target = $region21
  $region20: #{nam_forward.1} parent=0 // pred_region
    _
  $region21: #{nam_forward.1} parent=0 // pred_fallthru
    _
  // Predicated region
  $region22: #{nam_forward.1} parent=0 // pred_check
    _
  $region23: #{nam_forward.1} parent=0 // pred_check_branch
    %94 = sbr.rel (0) target = $region25
  $region24: #{nam_forward.1} parent=0 // pred_region
    _
  $region25: #{nam_forward.1} parent=0 // pred_fallthru
    _

</llo_original>
